<compile_context>
chip_gen: v7x
topology: tpu7x:2x2x1
jax: 0.10.0
libtpu: 0.0.40
codegen_flags: <defaults>
</compile_context>

<pallas_src>
import functools
import math

import jax
import jax.numpy as jnp
from jax import lax
from jax.experimental import pallas as pl
from jax.experimental.pallas import tpu as pltpu


_TILE_N = 512  # rows per grid step (multiple of 8); small inputs use one tile


def _round_up(x, m):
    return ((x + m - 1) // m) * m


# ----------------------------------------------------------------------------
# Pallas kernels
# ----------------------------------------------------------------------------
def _sine_kernel(x_ref, expand_ref, phase_ref, o_ref):
    """out[n, j] = sin(x[n, ch(j)] * inv_denom(j) + phase(j)).

    x_ref:      (TILE_N, C) compact coordinates / times
    expand_ref: (C, D) block-diagonal inv-denominator expansion (resident)
    phase_ref:  (1, D) phase shift (pi/2 on cos columns)  -> single sin on EUP
    o_ref:      (TILE_N, D) lane-dense output
    """
    x = x_ref[...]
    e = expand_ref[...]
    if x.shape[1] == 1:
        # temporal path: pure VPU broadcast-mul, avoid a K=1 matmul
        arg = x * e
    else:
        arg = jnp.dot(x, e, preferred_element_type=jnp.float32)
    o_ref[...] = jnp.sin(arg + phase_ref[...])


def _learned_interp_kernel(vals_ref, table_ref, o_ref, *, emb_num, channels):
    """Linear interpolation into learned tables via ONE weighted-one-hot matmul.

    vals_ref:  (TILE_N, C) values in "table units" before *emb_num scaling
    table_ref: (C*E, C*f) block-diagonal per-channel table (resident)
    o_ref:     (TILE_N, C*f) lane-dense output
    """
    v = vals_ref[...]                                        # (N, C)
    e_num = float(emb_num)
    data = v * e_num
    left_f = jnp.floor(jnp.clip(data, 0.0, e_num - 1.0))     # == clamp().long()
    right_f = jnp.minimum(left_f + 1.0, e_num - 1.0)
    lw = data - left_f                                       # left_weight (unclamped data)
    rw = 1.0 - lw                                            # right_weight
    left_i = left_f.astype(jnp.int32)
    right_i = right_f.astype(jnp.int32)

    n = v.shape[0]
    cols = channels * emb_num
    col_iota = lax.broadcasted_iota(jnp.int32, (n, cols), 1)

    # Combined weighted one-hot over the block-diagonal column space.
    # NOTE: torch quirk preserved -> left_weight multiplies the RIGHT embedding.
    oh = jnp.zeros((n, cols), jnp.float32)
    for c in range(channels):                                # static unroll, C is small
        base = c * emb_num
        lcol = left_i[:, c:c + 1] + base
        rcol = right_i[:, c:c + 1] + base
        oh = oh + rw[:, c:c + 1] * (col_iota == lcol).astype(jnp.float32)
        oh = oh + lw[:, c:c + 1] * (col_iota == rcol).astype(jnp.float32)

    o_ref[...] = jnp.dot(oh, table_ref[...], preferred_element_type=jnp.float32)


# ----------------------------------------------------------------------------
# pallas_call wrappers (tiled over N, constants/tables resident)
# ----------------------------------------------------------------------------
def _choose_tile(n):
    return min(_TILE_N, _round_up(max(n, 1), 8))


def _sine_call(x, expand, phase):
    n, c = x.shape
    d = expand.shape[1]
    tile = _choose_tile(n)
    n_pad = _round_up(n, tile)
    x = x.astype(jnp.float32)
    if n_pad != n:
        x = jnp.pad(x, ((0, n_pad - n), (0, 0)))
    out = pl.pallas_call(
        _sine_kernel,
        grid=(n_pad // tile,),
        in_specs=[
            pl.BlockSpec((tile, c), lambda i: (i, 0)),
            pl.BlockSpec((c, d), lambda i: (0, 0)),   # resident
            pl.BlockSpec((1, d), lambda i: (0, 0)),   # resident
        ],
        out_specs=pl.BlockSpec((tile, d), lambda i: (i, 0)),
        out_shape=jax.ShapeDtypeStruct((n_pad, d), jnp.float32),
        compiler_params=pltpu.CompilerParams(dimension_semantics=("parallel",)),
    )(x, expand.astype(jnp.float32), phase.astype(jnp.float32))
    return out[:n]


def _learned_call(vals, big_table, emb_num, channels):
    n, c = vals.shape
    ce, cf = big_table.shape
    tile = _choose_tile(n)
    n_pad = _round_up(n, tile)
    vals = vals.astype(jnp.float32)
    if n_pad != n:
        vals = jnp.pad(vals, ((0, n_pad - n), (0, 0)))
    kern = functools.partial(_learned_interp_kernel, emb_num=emb_num, channels=channels)
    out = pl.pallas_call(
        kern,
        grid=(n_pad // tile,),
        in_specs=[
            pl.BlockSpec((tile, c), lambda i: (i, 0)),
            pl.BlockSpec((ce, cf), lambda i: (0, 0)),  # resident block-diag table
        ],
        out_specs=pl.BlockSpec((tile, cf), lambda i: (i, 0)),
        out_shape=jax.ShapeDtypeStruct((n_pad, cf), jnp.float32),
        compiler_params=pltpu.CompilerParams(dimension_semantics=("parallel",)),
    )(vals, big_table.astype(jnp.float32))
    return out[:n]


# ----------------------------------------------------------------------------
# Embedding module (JAX / Pallas port)
# ----------------------------------------------------------------------------
class Embedding:
    EMB_TYPES = {"temp": {}, "pos": {"over_boxes"}, "off": {}, None: {}}
    EMB_MODES = {"fixed": {"temperature", "scale", "normalize"},
                 "learned": {"emb_num"}, "off": {}}

    def __init__(self, emb_type, mode, features, n_points=1, emb_num=16,
                 over_boxes=True, temperature=10000, normalize=False,
                 scale=None, mlp_cfg=None, key=None):
        self._check_init_args(emb_type, mode)
        self.emb_type = emb_type
        self.mode = mode
        self.features = features
        self.emb_num = emb_num
        self.over_boxes = over_boxes
        self.temperature = temperature
        self.normalize = normalize
        self.scale = scale
        self.n_points = n_points

        if self.normalize and self.scale is None:
            self.scale = 2 * math.pi

        # TODO(synk): MLP projection head (mlp_cfg) not implemented; identity only.
        if mlp_cfg is not None and mlp_cfg.get("num_layers", 0) > 0:
            raise NotImplementedError("mlp_cfg projection head not implemented")

        self._emb_func = lambda t: jnp.zeros((t.shape[0], self.features), t.dtype)
        self.lookup = None
        self._big_table = None
        if key is None:
            key = jax.random.PRNGKey(42)

        if self.mode == "learned":
            if self.emb_type == "pos":
                c = 4 * n_points
                f = self.features // c
                # deterministic init of the nn.Embedding weight (normal(0,1))
                self.lookup = jax.random.normal(
                    key, (self.emb_num * c, f), jnp.float32)
                # (E*C, f) -> per-channel (C, E, f) -> block-diagonal (C*E, C*f)
                table_c = jnp.transpose(
                    self.lookup.reshape(self.emb_num, c, f), (1, 0, 2))
                eye_c = jnp.eye(c, dtype=jnp.float32)
                self._big_table = (
                    eye_c[:, None, :, None] * table_c[:, :, None, :]
                ).reshape(c * self.emb_num, c * f)
                self._emb_func = self._learned_pos_embedding
            elif self.emb_type == "temp":
                self.lookup = jax.random.normal(
                    key, (self.emb_num, self.features), jnp.float32)
                self._big_table = self.lookup                 # C = 1
                self._emb_func = self._learned_temp_embedding
        elif self.mode == "fixed":
            if self.emb_type == "pos":
                self._emb_func = self._sine_box_embedding
            elif self.emb_type == "temp":
                self._emb_func = self._sine_temp_embedding

    def _check_init_args(self, emb_type, mode):
        if emb_type.lower() not in self.EMB_TYPES:
            raise ValueError(f"bad emb_type {emb_type}")
        if mode.lower() not in self.EMB_MODES:
            raise ValueError(f"bad mode {mode}")

    def forward(self, seq_positions):
        emb = self._emb_func(seq_positions)
        if emb.shape[-1] != self.features:
            raise RuntimeError(
                f"Output embedding dimension is {emb.shape[-1]} but requested "
                f"{self.features} dimensions!")
        return emb

    __call__ = forward

    # ----- fixed sine box (pos) embedding ------------------------------------
    def _sine_box_embedding(self, boxes):
        if self.scale is not None and self.normalize is False:
            raise ValueError("normalize should be True if scale is passed")
        if boxes.ndim == 3:
            boxes = boxes[None]                                 # (1, N, A, 4)
        if self.normalize:
            boxes = boxes / (boxes[:, :, -1:] + 1e-6) * self.scale

        b, n, a, _ = boxes.shape
        fq = self.features // 4
        fe = self.features // 8
        c = a * 4

        # per within-channel column: [sin block (fe) | cos block (fe)],
        # both use denom d[m] = T^(2m/fq); cos(x) = sin(x + pi/2).
        k = jnp.arange(fe, dtype=jnp.float32)
        inv_d = 1.0 / (jnp.float32(self.temperature) ** (2.0 * k / fq))
        inv_within = jnp.tile(inv_d, 2)                                     # (fq,)
        phase_within = jnp.concatenate(
            [jnp.zeros(fe, jnp.float32), jnp.full((fe,), jnp.pi / 2, jnp.float32)])

        eye_c = jnp.eye(c, dtype=jnp.float32)
        expand = (eye_c[:, :, None] * inv_within[None, None, :]).reshape(c, c * fq)
        phase = jnp.tile(phase_within, c)[None, :]                          # (1, C*fq)

        x = boxes.reshape(b * n, c).astype(jnp.float32)                     # compact (N, C)
        pos_emb = _sine_call(x, expand, phase)                              # (N, C*fq)
        # identity MLP; matches torch .view(boxes.shape[1], features)
        return pos_emb.reshape(n, self.features)

    # ----- fixed sine temporal embedding --------------------------------------
    def _sine_temp_embedding(self, times):
        d = self.features
        temp = jnp.float32(self.temperature)
        t = jnp.trunc(times.astype(jnp.float32)).reshape(-1, 1)             # times.int()

        k = jnp.arange(d // 2, dtype=jnp.float32)
        inv_den = 1.0 / (temp ** (2.0 * k / d))                             # (d//2,)
        expand = jnp.repeat(inv_den, 2)[None, :]                            # col j -> 1/den[j//2]
        phase = jnp.where(jnp.arange(d) % 2 == 0, 0.0, jnp.pi / 2
                          ).astype(jnp.float32)[None, :]                    # even->sin, odd->cos

        emb = _sine_call(t, expand, phase)                                  # (M, d)
        return emb.reshape(times.shape + (d,))

    # ----- learned positional embedding ---------------------------------------
    def _learned_pos_embedding(self, boxes):
        n, a, _ = boxes.shape
        if not self.over_boxes:
            # TODO(synk): over_boxes=False path mirrors a shape-inconsistent torch branch.
            raise NotImplementedError("over_boxes=False not supported")

        c = a * 4
        vals = boxes.reshape(n, c).astype(jnp.float32)
        pos_emb = _learned_call(vals, self._big_table, self.emb_num, c)     # (N, C*f)
        return pos_emb.reshape(n, self.features)

    # ----- learned temporal embedding ------------------------------------------
    def _learned_temp_embedding(self, times):
        n = times.shape[0]
        t = times.reshape(n, 1).astype(jnp.float32)
        temp_emb = _learned_call(t, self._big_table, self.emb_num, 1)       # (N, F)
        return temp_emb.reshape(n, self.features)


# ----------------------------------------------------------------------------
if __name__ == "__main__":
    key = jax.random.PRNGKey(0)
    k_box, k_lp, k_lt = jax.random.split(key, 3)

    N, A, F, E = 8, 1, 32, 16
    boxes = jax.random.uniform(k_box, (N, A, 4), jnp.float32)          # [y1,x1,y2,x2] in [0,1)
    times = jnp.repeat(jnp.arange(4, dtype=jnp.float32), 2)            # (8,) frame indices
    times_norm = times / 4.0                                           # normalized for learned emb

    emb_fixed_pos = Embedding("pos", "fixed", F, n_points=A)
    emb_fixed_temp = Embedding("temp", "fixed", F)
    emb_learned_pos = Embedding("pos", "learned", F, n_points=A, emb_num=E, key=k_lp)
    emb_learned_temp = Embedding("temp", "learned", F, emb_num=E, key=k_lt)

    outs = [
        emb_fixed_pos(boxes),
        emb_fixed_temp(times),
        emb_learned_pos(boxes),
        emb_learned_temp(times_norm),
    ]
    for o in outs:
        jax.block_until_ready(o)
        assert o.shape == (N, F), o.shape
        assert o.dtype == jnp.float32
        assert bool(jnp.all(jnp.isfinite(o)))

    # quick sanity vs pure-JAX reference for the fixed temporal embedding
    d = F
    j = jnp.arange(d)
    den = jnp.float32(10000.0) ** (2.0 * (j // 2).astype(jnp.float32) / d)
    ref = jnp.where(j % 2 == 0,
                    jnp.sin(times[:, None] / den[None, :]),
                    jnp.cos(times[:, None] / den[None, :]))
    assert bool(jnp.allclose(outs[1], ref, atol=1e-5)), "fixed temp mismatch"

    print("KERNEL_OK")
</pallas_src>

<mosaic_0001>
module attributes {stable_mosaic.version = 11 : i64} {
  func.func @_sine_kernel(%arg0: i32, %arg1: memref<8x4xf32, #tpu.memory_space<vmem>>, %arg2: memref<4x32xf32, #tpu.memory_space<vmem>>, %arg3: memref<1x32xf32, #tpu.memory_space<vmem>>, %arg4: memref<8x32xf32, #tpu.memory_space<vmem>>) attributes {dimension_semantics = [#tpu.dimension_semantics<parallel>], iteration_bounds = array<i64: 1>, scalar_prefetch = 0 : i64, scratch_operands = 0 : i64, tpu.core_type = #tpu.core_type<tc>, window_params = [{transform_indices = @transform_0, window_bounds = array<i64: 8, 4>}, {pipeline_mode = #tpu.pipeline_mode<synchronous>, transform_indices = @transform_1, window_bounds = array<i64: 4, 32>}, {pipeline_mode = #tpu.pipeline_mode<synchronous>, transform_indices = @transform_2, window_bounds = array<i64: 1, 32>}, {transform_indices = @transform_3, window_bounds = array<i64: 8, 32>}]} {
    %c0 = arith.constant 0 : index
    %c0_0 = arith.constant 0 : index
    %0 = vector.load %arg1[%c0, %c0_0] : memref<8x4xf32, #tpu.memory_space<vmem>>, vector<8x4xf32>
    %c0_1 = arith.constant 0 : index
    %c0_2 = arith.constant 0 : index
    %1 = vector.load %arg2[%c0_1, %c0_2] : memref<4x32xf32, #tpu.memory_space<vmem>>, vector<4x32xf32>
    %cst = arith.constant dense<0.000000e+00> : vector<8x32xf32>
    %2 = tpu.matmul %0, %1, %cst {dimension_numbers = #tpu.dot_dimension_numbers<[1], [0], [0], [1], [0, 0, 1, 1], [], []>} : vector<8x4xf32>, vector<4x32xf32>, vector<8x32xf32> -> vector<8x32xf32>
    %c0_3 = arith.constant 0 : index
    %c0_4 = arith.constant 0 : index
    %3 = vector.load %arg3[%c0_3, %c0_4] : memref<1x32xf32, #tpu.memory_space<vmem>>, vector<1x32xf32>
    %4 = vector.broadcast %3 : vector<1x32xf32> to vector<8x32xf32>
    %5 = arith.addf %2, %4 : vector<8x32xf32>
    %6 = math.sin %5 : vector<8x32xf32>
    %c0_5 = arith.constant 0 : index
    %c0_6 = arith.constant 0 : index
    %7 = vector.load %arg4[%c0_5, %c0_6] : memref<8x32xf32, #tpu.memory_space<vmem>>, vector<8x32xf32>
    tpu.vector_store %arg4[%c0_5, %c0_6], %6 {strides = array<i32>} : memref<8x32xf32, #tpu.memory_space<vmem>>, vector<8x32xf32>,
    return
  }
  func.func @transform_0(%arg0: i32) -> (i32, i32) {
    %c0_i32 = arith.constant 0 : i32
    %c0_i32_0 = arith.constant 0 : i32
    return %arg0, %c0_i32 : i32, i32
  }
  func.func @transform_1(%arg0: i32) -> (i32, i32) {
    %c0_i32 = arith.constant 0 : i32
    %c0_i32_0 = arith.constant 0 : i32
    %c0_i32_1 = arith.constant 0 : i32
    return %c0_i32, %c0_i32_0 : i32, i32
  }
  func.func @transform_2(%arg0: i32) -> (i32, i32) {
    %c0_i32 = arith.constant 0 : i32
    %c0_i32_0 = arith.constant 0 : i32
    %c0_i32_1 = arith.constant 0 : i32
    return %c0_i32, %c0_i32_0 : i32, i32
  }
  func.func @transform_3(%arg0: i32) -> (i32, i32) {
    %c0_i32 = arith.constant 0 : i32
    %c0_i32_0 = arith.constant 0 : i32
    return %arg0, %c0_i32 : i32, i32
  }
}

</mosaic_0001>

<llo_original>
// kernel: tpu_custom_call.1
$region0: #{tpu_custom_call.1}
  #allocation0 [shape = 'u32[]', space=smem, size = 0x4, offset = 0x4, fixed_abs, tag = 'smem constant byte address 0x4 - core index']
  #allocation1 [shape = 'u32[144,128]{1,0:T(1,128)}', space=vmem, size = 0x12000, scoped, tag = 'internal scratch']
  %s0 = inlined_call_operand.vmem [shape: f32[8,4], index: 0, kind: input, shape index: {}]
  %s1 = inlined_call_operand.vmem [shape: f32[4,32], index: 1, kind: input, shape index: {}]
  %s2 = inlined_call_operand.vmem [shape: f32[1,32], index: 2, kind: input, shape index: {}]
  %s3 = inlined_call_operand.hbm [shape: f32[8,32], index: 3, kind: output, shape index: {}]
  %s4 = sld [smem:[#allocation0]]
  $region22: #{tpu_custom_call.1} parent=0
    _
  %s6 = ssub.s32 1, %s4
  %s7 = scalar_select 0, %s6, %s4
  $region1: #{tpu_custom_call.1} parent=0
    #allocation2 [shape = 'u8[4096]{0}', space=vmem, size = 0x1000, scoped, tag = 'output window, operand 0, single buffered']
    #allocation3 [shape = 's32[1]{0}', space=sflag, size = 0x4, scoped, tag = 'scoped memory for tpu_custom_call.1']
    %8 = vsyncpa [#allocation3], 0
    // Predicated region
    $region2: #{tpu_custom_call.1} parent=1 // pred_check
      _
    $region3: #{tpu_custom_call.1} parent=1 // pred_check_branch
      %10 = sbr.rel (0) target = $region5
    $region4: #{tpu_custom_call.1} parent=1 // pred_region
      _
    $region5: #{tpu_custom_call.1} parent=1 // pred_fallthru
      _
    // Predicated region
    $region6: #{tpu_custom_call.1} parent=1 // pred_check
      _
    $region7: #{tpu_custom_call.1} parent=1 // pred_check_branch
      %12 = sbr.rel (0) target = $region9
    $region8: #{tpu_custom_call.1} parent=1 // pred_region
      _
    $region9: #{tpu_custom_call.1} parent=1 // pred_fallthru
      _
    // Predicated region
    $region10: #{tpu_custom_call.1} parent=1 // pred_check
      _
    $region11: #{tpu_custom_call.1} parent=1 // pred_check_branch
      %14 = sbr.rel (0) target = $region13
    $region12: #{tpu_custom_call.1} parent=1 // pred_region
      _
    $region13: #{tpu_custom_call.1} parent=1 // pred_fallthru
      _
    %v15 = vld [vmem:[%s0] sm:$0xff]
    %v16 = vld [vmem:[%s1] sm:$0xf]
    %v17 = vld [vmem:[%s2] sm:$0x1]
    %v19 = vlaneseq
    %v20 = vshrl.u32 %v19, 7
    %v21 = vsub.s32 0, %v20
    %v22 = vrot.slane %v17, %v21
    %vm24 = vcmask 31744
    %v26 = vsel %vm24, %v15, 0
    %vm28 = vcmask 1043456
    %v30 = vsel %vm28, %v16, 0
    %32 = vmatprep.subr.mxu0 0.0
    %33 = vmatpush1.msra.mxu0 %v30
    %34 = vmatprep.subr.mxu0 0.0
    %35 = vmatpush1.msra.mxu0 0.0
    %36 = vmatprep.subr.mxu0 0.0
    %37 = vmatpush1.msra.mxu0 0.0
    %38 = vmatprep.subr.mxu0 0.0
    %39 = vmatpush1.msra.mxu0 0.0
    %40 = vmatprep.subr.mxu0 0.0
    %41 = vmatpush1.msra.mxu0 0.0
    %42 = vmatprep.subr.mxu0 0.0
    %43 = vmatpush1.msra.mxu0 0.0
    %44 = vmatprep.subr.mxu0 0.0
    %45 = vmatpush1.msra.mxu0 0.0
    %46 = vmatprep.subr.mxu0 0.0
    %47 = vmatpush1.msra.mxu0 0.0
    %48 = vmatprep.subr.mxu0 0.0
    %49 = vmatpush1.msra.mxu0 0.0
    %50 = vmatprep.subr.mxu0 0.0
    %51 = vmatpush1.msra.mxu0 0.0
    %52 = vmatprep.subr.mxu0 0.0
    %53 = vmatpush1.msra.mxu0 0.0
    %54 = vmatprep.subr.mxu0 0.0
    %55 = vmatpush1.msra.mxu0 0.0
    %56 = vmatprep.subr.mxu0 0.0
    %57 = vmatpush1.msra.mxu0 0.0
    %58 = vmatprep.subr.mxu0 0.0
    %59 = vmatpush1.msra.mxu0 0.0
    %60 = vmatprep.subr.mxu0 0.0
    %61 = vmatpush1.msra.mxu0 0.0
    %62 = vmatprep.subr.mxu0 0.0
    %63 = vmatpush1.msra.mxu0 0.0
    %64 = vmatprep.subr.mxu0 0.0
    %65 = vmatpush1.msra.mxu0 0.0
    %66 = vmatprep.subr.mxu0 0.0
    %67 = vmatpush1.msra.mxu0 0.0
    %68 = vmatprep.subr.mxu0 0.0
    %69 = vmatpush1.msra.mxu0 0.0
    %70 = vmatprep.subr.mxu0 0.0
    %71 = vmatpush1.msra.mxu0 0.0
    %72 = vmatprep.subr.mxu0 0.0
    %73 = vmatpush1.msra.mxu0 0.0
    %74 = vmatprep.subr.mxu0 0.0
    %75 = vmatpush1.msra.mxu0 0.0
    %76 = vmatprep.subr.mxu0 0.0
    %77 = vmatpush1.msra.mxu0 0.0
    %78 = vmatprep.subr.mxu0 0.0
    %79 = vmatpush1.msra.mxu0 0.0
    %80 = vmatprep.subr.mxu0 0.0
    %81 = vmatpush1.msra.mxu0 0.0
    %82 = vmatprep.subr.mxu0 0.0
    %83 = vmatpush1.msra.mxu0 0.0
    %84 = vmatprep.subr.mxu0 0.0
    %85 = vmatpush1.msra.mxu0 0.0
    %86 = vmatprep.subr.mxu0 0.0
    %87 = vmatpush1.msra.mxu0 0.0
    %88 = vmatprep.subr.mxu0 0.0
    %89 = vmatpush1.msra.mxu0 0.0
    %90 = vmatprep.subr.mxu0 0.0
    %91 = vmatpush1.msra.mxu0 0.0
    %92 = vmatprep.subr.mxu0 0.0
    %93 = vmatpush1.msra.mxu0 0.0
    %94 = vmatprep.subr.mxu0 0.0
    %95 = vmatpush1.msra.mxu0 0.0
    %96 = vmatprep.mubr.f32.mxu0 0.0
    %97 = vmatmul.mubr.f32.gmra.mrb[0].mxu0 %v26
    %v98 = vpop.f32.mrb[0].mxu0
    %v99 = vadd.f32 %v22, %v98
    %v100 = vpop.f32.mrb[0].mxu0
    %101 = vdwg.mxu0
    %v102 = vand.u32 2147483647, %v99
    %vm103 = vcmp.le.f32.partialorder %v102, 0.7853982
    %vm104 = vcmp.lt.s32.totalorder %v99, 0
    %v105 = vand.u32 %v99, 2139095040
    %v106 = vshrl.u32 %v105, 23
    %v107 = vsub.s32 %v106, 127
    %v108 = vand.u32 2147483647, %v99
    %v109 = vand.u32 %v108, 8388607
    %v110 = vor.u32 %v109, 8388608
    %v111 = vsub.s32 0, %v110
    %v112 = vadd.s32 %v107, 1
    %vm113 = vcmp.gt.s32.totalorder %v112, 0
    %v114 = vsel %vm113, %v112, 0
    %v115 = vshrl.u32 %v114, 5
    %v116 = vand.u32 %v114, 31
    %v117 = vsub.s32 32, %v116
    %v118 = vshrl.u32 683565275, %v117
    %v119 = vshll.u32 683565275, %v116
    %v120 = vshrl.u32 2475754826, %v117
    %v121 = vor.u32 %v119, %v120
    %v122 = vshll.u32 2475754826, %v116
    %v123 = vshrl.u32 2131351028, %v117
    %v124 = vor.u32 %v122, %v123
    %v125 = vshll.u32 2131351028, %v116
    %v126 = vshrl.u32 2102212464, %v117
    %v127 = vor.u32 %v125, %v126
    %v128 = vshll.u32 2102212464, %v116
    %v129 = vshrl.u32 920167782, %v117
    %v130 = vor.u32 %v128, %v129
    %v131 = vshll.u32 920167782, %v116
    %v132 = vshrl.u32 1326507024, %v117
    %v133 = vor.u32 %v131, %v132
    %vm134 = vcmp.lt.s32.totalorder %v115, 1
    %vm135 = vcmp.lt.s32.totalorder %v115, 2
    %vm136 = vcmp.lt.s32.totalorder %v115, 3
    %vm137 = vcmp.lt.s32.totalorder %v115, 4
    %v138 = vsel %vm134, %v118, %v121
    %v139 = vsel %vm137, %v127, 2102212464
    %v140 = vsel %vm136, %v124, %v139
    %v141 = vsel %vm135, %v138, %v140
    %v142 = vsel %vm134, %v121, %v124
    %v143 = vsel %vm137, %v130, 920167782
    %v144 = vsel %vm136, %v127, %v143
    %v145 = vsel %vm135, %v142, %v144
    %v146 = vsel %vm134, %v124, %v127
    %v147 = vsel %vm137, %v133, 1326507024
    %v148 = vsel %vm136, %v130, %v147
    %v149 = vsel %vm135, %v146, %v148
    %v150 = vshll.u32 %v110, 8
    %v151 = vmul.u32.u64.compose %v150, %v149
    %v152 = vextract.low.u32 %v151
    %v153 = vextract.high.u32 %v151
    %v154 = vmul.u32.u64.compose %v150, %v145
    %v155 = vextract.low.u32 %v154
    %v156 = vextract.high.u32 %v154
    %v157 = vmul.u32 %v150, %v141
    %v158 = vadd.s32 %v153, %v155
    %vm159 = vc.u32 %v153, %v155
    %v160 = vadd.s32 %v156, 1
    %v161 = vsel %vm159, %v160, %v156
    %v162 = vadd.s32 %v157, %v161
    %v163 = vadd.s32 %v162, 536870912
    %v164 = vshrl.u32 %v163, 30
    %v165 = vshll.u32 %v164, 30
    %v166 = vsub.s32 %v162, %v165
    %vm167 = vcmp.lt.s32.totalorder %v166, 0
    %v168 = vsub.s32 0, %v166
    %v169 = vsel %vm167, %v168, %v166
    %v170 = vclz %v169
    %v171 = vsub.s32 %v170, 2
    %vm172 = vcmp.gt.s32.totalorder 0, %v171
    %v173 = vsel %vm172, 0, %v171
    %v174 = vsub.s32 32, %v173
    %v175 = vshll.u32 %v166, %v173
    %v176 = vshrl.u32 %v158, %v174
    %v177 = vor.u32 %v175, %v176
    %v178 = vsub.s32 4294967266, %v173
    %v179 = vadd.s32 %v178, 127
    %v180 = vshll.u32 %v179, 23
    %v181 = vor.u32 4788187, %v180
    %v182 = vand.u32 2147483647, %v181
    %v184 = vcvt.s32.f32 %v177
    %v185 = vmul.f32 %v184, %v182
    %v186 = vxor.u32 %v185, 2147483648
    %v187 = vsel %vm104, %v186, %v185
    %v188 = vsub.s32 4, %v164
    %v189 = vsel %vm104, %v188, %v164
    %v190 = vsel %vm103, %v99, %v187
    %v191 = vsel %vm103, 0, %v189
    %v192 = vcosq.f32.pop %v190
    %v193 = vsinq.f32.pop %v190
    %vm194 = vweird.f32 %v99
    %v195 = vadd.s32 %v191, 3
    %v196 = vand.u32 %v195, 3
    %vm197 = vcmp.lt.s32.totalorder %v196, 2
    %vm198 = vcmp.eq.s32.totalorder %v196, 0
    %v199 = vxor.u32 %v193, 2147483648
    %v200 = vsel %vm198, %v192, %v199
    %vm201 = vcmp.eq.s32.totalorder %v196, 2
    %v202 = vxor.u32 %v192, 2147483648
    %v203 = vsel %vm201, %v202, %v193
    %v204 = vsel %vm197, %v200, %v203
    %v205 = vsel %vm194, nan, %v204
    %vm206 = vcmask 261120
    %207 = vst.msk [vmem:[#allocation2] sm:$0xff] %vm206, %v205
    // Predicated region
    $region14: #{tpu_custom_call.1} parent=1 // pred_check
      _
    $region15: #{tpu_custom_call.1} parent=1 // pred_check_branch
      %209 = sbr.rel (0) target = $region17
    $region16: #{tpu_custom_call.1} parent=1 // pred_region
      %s211 = ssub.s32 128, 128
      %212 = vsyncadd [#allocation3], %s211
      %s214 = sshll.u32 [#allocation2], 4
      %s215 = int_to_ptr.vmem [resolvable:$true] %s214
      %217 = dma.vmem_to_hbm [thread:$0]  %s215, 128, %s3, [#allocation3]
    $region17: #{tpu_custom_call.1} parent=1 // pred_fallthru
      _
    // Predicated region
    $region18: #{tpu_custom_call.1} parent=1 // pred_check
      _
    $region19: #{tpu_custom_call.1} parent=1 // pred_check_branch
      %219 = sbr.rel (0) target = $region21
    $region20: #{tpu_custom_call.1} parent=1 // pred_region
      %220 = dma.done [#allocation3], 128
    $region21: #{tpu_custom_call.1} parent=1 // pred_fallthru
      _
    %221 = vsyncpa [#allocation3], 1

</llo_original>
